<compile_context>
chip_gen: v7x
topology: tpu7x:2x2x1
jax: 0.10.0
libtpu: 0.0.40
codegen_flags: <defaults>
</compile_context>

<pallas_src>
import functools

import jax
import jax.numpy as jnp
from jax.experimental import pallas as pl
from jax.experimental.pallas import tpu as pltpu

LANE = 128


def _round_up(x, m):
    return ((x + m - 1) // m) * m


def _pad2(a, rows, cols):
    r, c = a.shape
    return jnp.pad(a, ((0, rows - r), (0, cols - c)))


def teacher_kernel(x_ref, w1_ref, w2_ref, wh_ref, b_ref, out_ref):
    """One batch-tile of the fused MLP forward.

    x_ref  : (TB, input_dim)        unpadded input rows
    w1_ref : (input_dim, h_pad)     layer-1 weight (lane-padded cols)
    w2_ref : (h_pad, h2_pad)        layer-2 weight (zero-padded)
    wh_ref : (h2_pad, out_pad)      fused [actor | critic] head weight
    b_ref  : (1, h_pad+h2_pad+out_pad)  all biases concatenated on lanes (f32)
    out_ref: (TB, out_pad)          fused [actor | critic] output
    """
    h_pad = w1_ref.shape[1]
    h2_pad = w2_ref.shape[1]
    cdt = w1_ref.dtype  # compute dtype for MXU operands (bf16 or f32)

    # Static, 128-aligned lane slices of the consolidated bias vector.
    b1 = b_ref[:, 0:h_pad]
    b2 = b_ref[:, h_pad:h_pad + h2_pad]
    bh = b_ref[:, h_pad + h2_pad:]

    x = x_ref[...].astype(cdt)
    # K = input_dim (tiny); Mosaic zero-masks the padded contraction lanes.
    z1 = jnp.dot(x, w1_ref[...], preferred_element_type=jnp.float32) + b1
    h1 = jnp.tanh(z1).astype(cdt)          # tanh in f32 (portable incl. v5e)
    z2 = jnp.dot(h1, w2_ref[...], preferred_element_type=jnp.float32) + b2
    h2 = jnp.tanh(z2).astype(cdt)
    out = jnp.dot(h2, wh_ref[...], preferred_element_type=jnp.float32) + bh
    out_ref[...] = out.astype(out_ref.dtype)


def prepare_params(params, compute_dtype=jnp.bfloat16):
    """One-time parameter prep (pad, fuse heads, cast). NOT per-forward work.

    Zero padding is exact: tanh(0)=0 and the padded weight rows/cols and bias
    lanes are zero, so padded lanes stay exactly 0 through the network.
    Returns (prepared dict, output_dim).
    """
    input_dim, h = params["w1"].shape
    h2 = params["w2"].shape[1]                    # = h + 1
    output_dim = params["wa"].shape[1]

    h_pad = _round_up(h, LANE)
    h2_pad = _round_up(h2, LANE)
    out_pad = _round_up(output_dim + 1, LANE)     # fused [actor | critic]

    w1 = _pad2(params["w1"], input_dim, h_pad).astype(compute_dtype)
    w2 = _pad2(params["w2"], h_pad, h2_pad).astype(compute_dtype)
    wh = _pad2(jnp.concatenate([params["wa"], params["wc"]], axis=1),
               h2_pad, out_pad).astype(compute_dtype)
    biases = jnp.concatenate(
        [_pad2(params["b1"], 1, h_pad),
         _pad2(params["b2"], 1, h2_pad),
         _pad2(jnp.concatenate([params["ba"], params["bc"]], axis=1), 1, out_pad)],
        axis=1).astype(jnp.float32)               # biases add to f32 accum

    return {"w1": w1, "w2": w2, "wh": wh, "b": biases}, output_dim


@functools.partial(jax.jit, static_argnames=("output_dim", "block_b"))
def teacher_forward(x, prep, *, output_dim, block_b=4096):
    """TeacherModel.forward in one Pallas kernel.

    x: [B, input_dim] float32; prep: output of prepare_params.
    Returns (actor [B, output_dim] f32, critic [B, 1] f32).
    """
    B, input_dim = x.shape
    h_pad = prep["w1"].shape[1]
    h2_pad = prep["w2"].shape[1]
    out_pad = prep["wh"].shape[1]
    out_dtype = prep["w1"].dtype                  # bf16 halves the writeback

    # Batch tile: multiple of 16 sublanes (safe for bf16 output tiling),
    # capped at ceil(B/2) so the grid has >=2 steps whenever possible
    # (v7x: both TensorCores busy), and at block_b for VMEM.
    tb = min(_round_up(block_b, 16), max(16, _round_up(pl.cdiv(B, 2), 16)))
    grid = (pl.cdiv(B, tb),)                      # partial last block is fine

    fused = pl.pallas_call(
        teacher_kernel,
        out_shape=jax.ShapeDtypeStruct((B, out_pad), out_dtype),
        grid=grid,
        in_specs=[
            # x: batch-tiled, feature dim unpadded (== full array dim).
            pl.BlockSpec((tb, input_dim), lambda i: (i, 0)),
            # Weights / biases: VMEM-resident, grid-invariant.
            pl.BlockSpec((input_dim, h_pad), lambda i: (0, 0)),
            pl.BlockSpec((h_pad, h2_pad), lambda i: (0, 0)),
            pl.BlockSpec((h2_pad, out_pad), lambda i: (0, 0)),
            pl.BlockSpec((1, h_pad + h2_pad + out_pad), lambda i: (0, 0)),
        ],
        out_specs=pl.BlockSpec((tb, out_pad), lambda i: (i, 0)),
        compiler_params=pltpu.CompilerParams(
            dimension_semantics=("parallel",),
            vmem_limit_bytes=32 * 1024 * 1024,
        ),
    )(x, prep["w1"], prep["w2"], prep["wh"], prep["b"])

    actor = fused[:, :output_dim].astype(jnp.float32)
    critic = fused[:, output_dim:output_dim + 1].astype(jnp.float32)
    return actor, critic


def init_params(key, input_dim, output_dim, hidden_layers):
    """Deterministic synthetic parameter init (uniform, roughly PyTorch-like).

    Weights stored as [in_features, out_features]; biases as [1, out_features].
    """
    keys = jax.random.split(key, 8)

    def unif(k, shape, fan_in):
        bound = 1.0 / jnp.sqrt(jnp.float32(fan_in))
        return jax.random.uniform(k, shape, jnp.float32, -bound, bound)

    h = hidden_layers
    return {
        "w1": unif(keys[0], (input_dim, h), input_dim),
        "b1": unif(keys[1], (1, h), input_dim),
        "w2": unif(keys[2], (h, h + 1), h),
        "b2": unif(keys[3], (1, h + 1), h),
        "wa": unif(keys[4], (h + 1, output_dim), h + 1),
        "ba": unif(keys[5], (1, output_dim), h + 1),
        "wc": unif(keys[6], (h + 1, 1), h + 1),
        "bc": unif(keys[7], (1, 1), h + 1),
    }


def reference_forward(x, p):
    h1 = jnp.tanh(x @ p["w1"] + p["b1"])
    h2 = jnp.tanh(h1 @ p["w2"] + p["b2"])
    return h2 @ p["wa"] + p["ba"], h2 @ p["wc"] + p["bc"]


if __name__ == "__main__":
    # Small CartPole-like shapes consistent with the module.
    batch, input_dim, output_dim, hidden_layers = 2, 4, 2, 32

    key = jax.random.PRNGKey(0)
    k_x, k_p = jax.random.split(key)
    x = jax.random.normal(k_x, (batch, input_dim), jnp.float32)
    params = init_params(k_p, input_dim, output_dim, hidden_layers)

    actor_ref, critic_ref = reference_forward(x, params)

    # --- exact f32 path: verifies kernel structure / padding semantics ---
    prep_f32, out_dim = prepare_params(params, compute_dtype=jnp.float32)
    actor32, critic32 = teacher_forward(x, prep_f32, output_dim=out_dim)
    jax.block_until_ready((actor32, critic32))
    assert actor32.shape == (batch, output_dim)
    assert critic32.shape == (batch, 1)
    assert jnp.allclose(actor32, actor_ref, atol=1e-5)
    assert jnp.allclose(critic32, critic_ref, atol=1e-5)

    # --- default bf16 compute path (fastest, esp. on v5e's bf16-only MXU);
    #     tolerance relaxed per review since inputs/weights are bf16 ---
    prep_bf16, out_dim = prepare_params(params)  # bf16 default
    actor16, critic16 = teacher_forward(x, prep_bf16, output_dim=out_dim)
    jax.block_until_ready((actor16, critic16))
    assert actor16.shape == (batch, output_dim)
    assert critic16.shape == (batch, 1)
    assert jnp.allclose(actor16, actor_ref, atol=5e-2, rtol=5e-2)
    assert jnp.allclose(critic16, critic_ref, atol=5e-2, rtol=5e-2)

    # TODO(synk): rtg()/rollout()/evaluate()/validate() are host-side RL-loop
    # code (env stepping, Categorical sampling) and are intentionally not
    # kernels.

    print("KERNEL_OK")
</pallas_src>

<mosaic_0001>
module attributes {stable_mosaic.version = 11 : i64} {
  func.func @teacher_kernel(%arg0: i32, %arg1: memref<16x4xf32, #tpu.memory_space<vmem>>, %arg2: memref<4x128xf32, #tpu.memory_space<vmem>>, %arg3: memref<128x128xf32, #tpu.memory_space<vmem>>, %arg4: memref<128x128xf32, #tpu.memory_space<vmem>>, %arg5: memref<1x384xf32, #tpu.memory_space<vmem>>, %arg6: memref<16x128xf32, #tpu.memory_space<vmem>>) attributes {dimension_semantics = [#tpu.dimension_semantics<parallel>], iteration_bounds = array<i64: 1>, scalar_prefetch = 0 : i64, scratch_operands = 0 : i64, tpu.core_type = #tpu.core_type<tc>, window_params = [{transform_indices = @transform_0, window_bounds = array<i64: 16, 4>}, {pipeline_mode = #tpu.pipeline_mode<synchronous>, transform_indices = @transform_1, window_bounds = array<i64: 4, 128>}, {pipeline_mode = #tpu.pipeline_mode<synchronous>, transform_indices = @transform_2, window_bounds = array<i64: 128, 128>}, {pipeline_mode = #tpu.pipeline_mode<synchronous>, transform_indices = @transform_3, window_bounds = array<i64: 128, 128>}, {pipeline_mode = #tpu.pipeline_mode<synchronous>, transform_indices = @transform_4, window_bounds = array<i64: 1, 384>}, {transform_indices = @transform_5, window_bounds = array<i64: 16, 128>}]} {
    %c0 = arith.constant 0 : index
    %c0_0 = arith.constant 0 : index
    %0 = vector.load %arg5[%c0, %c0_0] : memref<1x384xf32, #tpu.memory_space<vmem>>, vector<1x128xf32>
    %c0_1 = arith.constant 0 : index
    %c128 = arith.constant 128 : index
    %1 = vector.load %arg5[%c0_1, %c128] : memref<1x384xf32, #tpu.memory_space<vmem>>, vector<1x128xf32>
    %c0_2 = arith.constant 0 : index
    %c256 = arith.constant 256 : index
    %2 = vector.load %arg5[%c0_2, %c256] : memref<1x384xf32, #tpu.memory_space<vmem>>, vector<1x128xf32>
    %c0_3 = arith.constant 0 : index
    %c0_4 = arith.constant 0 : index
    %3 = vector.load %arg1[%c0_3, %c0_4] : memref<16x4xf32, #tpu.memory_space<vmem>>, vector<16x4xf32>
    %c0_5 = arith.constant 0 : index
    %c0_6 = arith.constant 0 : index
    %4 = vector.load %arg2[%c0_5, %c0_6] : memref<4x128xf32, #tpu.memory_space<vmem>>, vector<4x128xf32>
    %cst = arith.constant dense<0.000000e+00> : vector<16x128xf32>
    %5 = tpu.matmul %3, %4, %cst {dimension_numbers = #tpu.dot_dimension_numbers<[1], [0], [0], [1], [0, 0, 1, 1], [], []>} : vector<16x4xf32>, vector<4x128xf32>, vector<16x128xf32> -> vector<16x128xf32>
    %6 = vector.broadcast %0 : vector<1x128xf32> to vector<16x128xf32>
    %7 = arith.addf %5, %6 : vector<16x128xf32>
    %8 = math.tanh %7 : vector<16x128xf32>
    %c0_7 = arith.constant 0 : index
    %c0_8 = arith.constant 0 : index
    %9 = vector.load %arg3[%c0_7, %c0_8] : memref<128x128xf32, #tpu.memory_space<vmem>>, vector<128x128xf32>
    %cst_9 = arith.constant dense<0.000000e+00> : vector<16x128xf32>
    %10 = tpu.matmul %8, %9, %cst_9 {dimension_numbers = #tpu.dot_dimension_numbers<[1], [0], [0], [1], [0, 0, 1, 1], [], []>} : vector<16x128xf32>, vector<128x128xf32>, vector<16x128xf32> -> vector<16x128xf32>
    %11 = vector.broadcast %1 : vector<1x128xf32> to vector<16x128xf32>
    %12 = arith.addf %10, %11 : vector<16x128xf32>
    %13 = math.tanh %12 : vector<16x128xf32>
    %c0_10 = arith.constant 0 : index
    %c0_11 = arith.constant 0 : index
    %14 = vector.load %arg4[%c0_10, %c0_11] : memref<128x128xf32, #tpu.memory_space<vmem>>, vector<128x128xf32>
    %cst_12 = arith.constant dense<0.000000e+00> : vector<16x128xf32>
    %15 = tpu.matmul %13, %14, %cst_12 {dimension_numbers = #tpu.dot_dimension_numbers<[1], [0], [0], [1], [0, 0, 1, 1], [], []>} : vector<16x128xf32>, vector<128x128xf32>, vector<16x128xf32> -> vector<16x128xf32>
    %16 = vector.broadcast %2 : vector<1x128xf32> to vector<16x128xf32>
    %17 = arith.addf %15, %16 : vector<16x128xf32>
    %c0_13 = arith.constant 0 : index
    %c0_14 = arith.constant 0 : index
    %18 = vector.load %arg6[%c0_13, %c0_14] : memref<16x128xf32, #tpu.memory_space<vmem>>, vector<16x128xf32>
    tpu.vector_store %arg6[%c0_13, %c0_14], %17 {strides = array<i32>} : memref<16x128xf32, #tpu.memory_space<vmem>>, vector<16x128xf32>,
    return
  }
  func.func @transform_0(%arg0: i32) -> (i32, i32) {
    %c0_i32 = arith.constant 0 : i32
    %c0_i32_0 = arith.constant 0 : i32
    return %arg0, %c0_i32 : i32, i32
  }
  func.func @transform_1(%arg0: i32) -> (i32, i32) {
    %c0_i32 = arith.constant 0 : i32
    %c0_i32_0 = arith.constant 0 : i32
    %c0_i32_1 = arith.constant 0 : i32
    return %c0_i32, %c0_i32_0 : i32, i32
  }
  func.func @transform_2(%arg0: i32) -> (i32, i32) {
    %c0_i32 = arith.constant 0 : i32
    %c0_i32_0 = arith.constant 0 : i32
    %c0_i32_1 = arith.constant 0 : i32
    return %c0_i32, %c0_i32_0 : i32, i32
  }
  func.func @transform_3(%arg0: i32) -> (i32, i32) {
    %c0_i32 = arith.constant 0 : i32
    %c0_i32_0 = arith.constant 0 : i32
    %c0_i32_1 = arith.constant 0 : i32
    return %c0_i32, %c0_i32_0 : i32, i32
  }
  func.func @transform_4(%arg0: i32) -> (i32, i32) {
    %c0_i32 = arith.constant 0 : i32
    %c0_i32_0 = arith.constant 0 : i32
    %c0_i32_1 = arith.constant 0 : i32
    return %c0_i32, %c0_i32_0 : i32, i32
  }
  func.func @transform_5(%arg0: i32) -> (i32, i32) {
    %c0_i32 = arith.constant 0 : i32
    %c0_i32_0 = arith.constant 0 : i32
    return %arg0, %c0_i32 : i32, i32
  }
}

</mosaic_0001>

<llo_original>
// kernel: teacher_forward.1
$region0: #{teacher_forward.1}
  #allocation0 [shape = 'u32[]', space=smem, size = 0x4, offset = 0x4, fixed_abs, tag = 'smem constant byte address 0x4 - core index']
  #allocation1 [shape = 'u32[144,128]{1,0:T(1,128)}', space=vmem, size = 0x12000, scoped, tag = 'internal scratch']
  %s0 = inlined_call_operand.hbm [shape: f32[2,4], index: 0, kind: input, shape index: {}]
  %s1 = inlined_call_operand.vmem [shape: f32[4,128], index: 1, kind: input, shape index: {}]
  %s2 = inlined_call_operand.hbm [shape: f32[128,128], index: 2, kind: input, shape index: {}]
  %s3 = inlined_call_operand.hbm [shape: f32[128,128], index: 3, kind: input, shape index: {}]
  %s4 = inlined_call_operand.vmem [shape: f32[1,384], index: 4, kind: input, shape index: {}]
  %s5 = inlined_call_operand.vmem [shape: f32[2,128], index: 5, kind: output, shape index: {}]
  %s6 = sld [smem:[#allocation0]]
  $region72: #{teacher_forward.1} parent=0
    _
  %s8 = ssub.s32 1, %s6
  %s9 = scalar_select 0, %s8, %s6
  $region1: #{teacher_forward.1} parent=0
    #allocation2 [shape = 'u8[8192]{0}', space=vmem, size = 0x2000, scoped, tag = 'input window, operand 0, single buffered']
    #allocation3 [shape = 's32[1]{0}', space=sflag, size = 0x4, scoped, tag = 'scoped memory for teacher_forward.1']
    #allocation4 [shape = 'u8[65536]{0}', space=vmem, size = 0x10000, scoped, tag = 'input window, operand 2, single buffered']
    #allocation5 [shape = 's32[1]{0}', space=sflag, size = 0x4, scoped, tag = 'scoped memory for teacher_forward.1']
    #allocation6 [shape = 'u8[65536]{0}', space=vmem, size = 0x10000, scoped, tag = 'input window, operand 3, single buffered']
    #allocation7 [shape = 'u8[8192]{0}', space=vmem, size = 0x2000, scoped, tag = 'output window, operand 0, single buffered']
    %10 = vsyncpa [#allocation3], 0
    %11 = vsyncpa [#allocation5], 0
    // Predicated region
    $region2: #{teacher_forward.1} parent=1 // pred_check
      _
    $region3: #{teacher_forward.1} parent=1 // pred_check_branch
      %13 = sbr.rel (0) target = $region5
    $region4: #{teacher_forward.1} parent=1 // pred_region
      %s15 = ssub.s32 256, 32
      %16 = vsyncadd [#allocation3], %s15
      %s17 = sshll.u32 [#allocation2], 4
      %s18 = int_to_ptr.vmem [resolvable:$true] %s17
      %23 = dma.hbm_to_vmem [thread:$0]  %s0, 32, %s18, [#allocation3], 32, 32, 2
    $region5: #{teacher_forward.1} parent=1 // pred_fallthru
      _
    // Predicated region
    $region6: #{teacher_forward.1} parent=1 // pred_check
      _
    $region7: #{teacher_forward.1} parent=1 // pred_check_branch
      %25 = sbr.rel (0) target = $region9
    $region8: #{teacher_forward.1} parent=1 // pred_region
      _
    $region9: #{teacher_forward.1} parent=1 // pred_fallthru
      _
    // Predicated region
    $region10: #{teacher_forward.1} parent=1 // pred_check
      _
    $region11: #{teacher_forward.1} parent=1 // pred_check_branch
      %27 = sbr.rel (0) target = $region13
    $region12: #{teacher_forward.1} parent=1 // pred_region
      %s29 = ssub.s32 2048, 2048
      %30 = vsyncadd [#allocation5], %s29
      %s31 = sshll.u32 [#allocation4], 4
      %s32 = int_to_ptr.vmem [resolvable:$true] %s31
      %37 = dma.hbm_to_vmem [thread:$0]  %s2, 2048, %s32, [#allocation5], 128, 128, 8
    $region13: #{teacher_forward.1} parent=1 // pred_fallthru
      _
    // Predicated region
    $region14: #{teacher_forward.1} parent=1 // pred_check
      _
    $region15: #{teacher_forward.1} parent=1 // pred_check_branch
      %39 = sbr.rel (0) target = $region17
    $region16: #{teacher_forward.1} parent=1 // pred_region
      %s41 = ssub.s32 2048, 2048
      %42 = vsyncadd [#allocation5], %s41
      %s43 = sshll.u32 [#allocation6], 4
      %s44 = int_to_ptr.vmem [resolvable:$true] %s43
      %49 = dma.hbm_to_vmem [thread:$0]  %s3, 2048, %s44, [#allocation5], 128, 128, 8
    $region17: #{teacher_forward.1} parent=1 // pred_fallthru
      _
    // Predicated region
    $region18: #{teacher_forward.1} parent=1 // pred_check
      _
    $region19: #{teacher_forward.1} parent=1 // pred_check_branch
      %51 = sbr.rel (0) target = $region21
    $region20: #{teacher_forward.1} parent=1 // pred_region
      _
    $region21: #{teacher_forward.1} parent=1 // pred_fallthru
      _
    // Predicated region
    $region22: #{teacher_forward.1} parent=1 // pred_check
      _
    $region23: #{teacher_forward.1} parent=1 // pred_check_branch
      %53 = sbr.rel (0) target = $region25
    $region24: #{teacher_forward.1} parent=1 // pred_region
      %54 = dma.done [#allocation3], 256
    $region25: #{teacher_forward.1} parent=1 // pred_fallthru
      _
    // Predicated region
    $region26: #{teacher_forward.1} parent=1 // pred_check
      _
    $region27: #{teacher_forward.1} parent=1 // pred_check_branch
      %56 = sbr.rel (0) target = $region29
    $region28: #{teacher_forward.1} parent=1 // pred_region
      %57 = dma.done [#allocation5], 2048
    $region29: #{teacher_forward.1} parent=1 // pred_fallthru
      _
    // Predicated region
    $region30: #{teacher_forward.1} parent=1 // pred_check
      _
    $region31: #{teacher_forward.1} parent=1 // pred_check_branch
      %59 = sbr.rel (0) target = $region33
    $region32: #{teacher_forward.1} parent=1 // pred_region
      %60 = dma.done [#allocation5], 2048
    $region33: #{teacher_forward.1} parent=1 // pred_fallthru
      _
    %v61 = vld [vmem:[%s4] sm:$0x1]
    %v62 = vld [vmem:[%s4 + $0x1] sm:$0x1]
    %v63 = vld [vmem:[%s4 + $0x2] sm:$0x1]
    %v64 = vld [vmem:[#allocation2] sm:$0xff]
    %v65 = vld [vmem:[#allocation2 + $0x8] sm:$0xff]
    %v66 = vld [vmem:[%s1] sm:$0xf]
    %v68 = vlaneseq
    %v69 = vshrl.u32 %v68, 7
    %v70 = vsub.s32 0, %v69
    %v71 = vrot.slane %v61, %v70
    %vm73 = vcmask 31744
    %v75 = vsel %vm73, %v64, 0
    %v78 = vsel %vm73, %v65, 0
    %vm80 = vcmask 1043456
    %v82 = vsel %vm80, %v66, 0
    %84 = vmatprep.subr.mxu0 0.0
    %85 = vmatpush1.msra.mxu0 %v82
    %86 = vmatprep.subr.mxu0 0.0
    %87 = vmatpush1.msra.mxu0 0.0
    %88 = vmatprep.subr.mxu0 0.0
    %89 = vmatpush1.msra.mxu0 0.0
    %90 = vmatprep.subr.mxu0 0.0
    %91 = vmatpush1.msra.mxu0 0.0
    %92 = vmatprep.subr.mxu0 0.0
    %93 = vmatpush1.msra.mxu0 0.0
    %94 = vmatprep.subr.mxu0 0.0
    %95 = vmatpush1.msra.mxu0 0.0
    %96 = vmatprep.subr.mxu0 0.0
    %97 = vmatpush1.msra.mxu0 0.0
    %98 = vmatprep.subr.mxu0 0.0
    %99 = vmatpush1.msra.mxu0 0.0
    %100 = vmatprep.subr.mxu0 0.0
    %101 = vmatpush1.msra.mxu0 0.0
    %102 = vmatprep.subr.mxu0 0.0
    %103 = vmatpush1.msra.mxu0 0.0
    %104 = vmatprep.subr.mxu0 0.0
    %105 = vmatpush1.msra.mxu0 0.0
    %106 = vmatprep.subr.mxu0 0.0
    %107 = vmatpush1.msra.mxu0 0.0
    %108 = vmatprep.subr.mxu0 0.0
    %109 = vmatpush1.msra.mxu0 0.0
    %110 = vmatprep.subr.mxu0 0.0
    %111 = vmatpush1.msra.mxu0 0.0
    %112 = vmatprep.subr.mxu0 0.0
    %113 = vmatpush1.msra.mxu0 0.0
    %114 = vmatprep.subr.mxu0 0.0
    %115 = vmatpush1.msra.mxu0 0.0
    %116 = vmatprep.subr.mxu0 0.0
    %117 = vmatpush1.msra.mxu0 0.0
    %118 = vmatprep.subr.mxu0 0.0
    %119 = vmatpush1.msra.mxu0 0.0
    %120 = vmatprep.subr.mxu0 0.0
    %121 = vmatpush1.msra.mxu0 0.0
    %122 = vmatprep.subr.mxu0 0.0
    %123 = vmatpush1.msra.mxu0 0.0
    %124 = vmatprep.subr.mxu0 0.0
    %125 = vmatpush1.msra.mxu0 0.0
    %126 = vmatprep.subr.mxu0 0.0
    %127 = vmatpush1.msra.mxu0 0.0
    %128 = vmatprep.subr.mxu0 0.0
    %129 = vmatpush1.msra.mxu0 0.0
    %130 = vmatprep.subr.mxu0 0.0
    %131 = vmatpush1.msra.mxu0 0.0
    %132 = vmatprep.subr.mxu0 0.0
    %133 = vmatpush1.msra.mxu0 0.0
    %134 = vmatprep.subr.mxu0 0.0
    %135 = vmatpush1.msra.mxu0 0.0
    %136 = vmatprep.subr.mxu0 0.0
    %137 = vmatpush1.msra.mxu0 0.0
    %138 = vmatprep.subr.mxu0 0.0
    %139 = vmatpush1.msra.mxu0 0.0
    %140 = vmatprep.subr.mxu0 0.0
    %141 = vmatpush1.msra.mxu0 0.0
    %142 = vmatprep.subr.mxu0 0.0
    %143 = vmatpush1.msra.mxu0 0.0
    %144 = vmatprep.subr.mxu0 0.0
    %145 = vmatpush1.msra.mxu0 0.0
    %146 = vmatprep.subr.mxu0 0.0
    %147 = vmatpush1.msra.mxu0 0.0
    %148 = vmatprep.mubr.f32.mxu0 0.0
    %149 = vmatmul.mubr.f32.gmra.mrb[0].mxu0 %v75
    %v150 = vpop.f32.mrb[0].mxu0
    %v151 = vadd.f32 %v71, %v150
    %v152 = vpop.f32.mrb[0].mxu0
    %153 = vmatprep.mubr.f32.mxu0 0.0
    %154 = vmatmul.mubr.f32.gmra.mrb[0].mxu0 %v78
    %v155 = vpop.f32.mrb[0].mxu0
    %v156 = vadd.f32 %v71, %v155
    %v157 = vpop.f32.mrb[0].mxu0
    %158 = vdwg.mxu0
    %v159 = vtanh.pop %v151
    %v160 = vtanh.pop %v156
    %v161 = vld [vmem:[#allocation4] sm:$0xff]
    %v162 = vld [vmem:[#allocation4 + $0x8] sm:$0xff]
    %v163 = vld [vmem:[#allocation4 + $0x10] sm:$0xff]
    %v164 = vld [vmem:[#allocation4 + $0x18] sm:$0xff]
    %v165 = vld [vmem:[#allocation4 + $0x20] sm:$0xff]
    %v166 = vld [vmem:[#allocation4 + $0x28] sm:$0xff]
    %v167 = vld [vmem:[#allocation4 + $0x30] sm:$0xff]
    %v168 = vld [vmem:[#allocation4 + $0x38] sm:$0xff]
    %v169 = vld [vmem:[#allocation4 + $0x40] sm:$0xff]
    %v170 = vld [vmem:[#allocation4 + $0x48] sm:$0xff]
    %v171 = vld [vmem:[#allocation4 + $0x50] sm:$0xff]
    %v172 = vld [vmem:[#allocation4 + $0x58] sm:$0xff]
    %v173 = vld [vmem:[#allocation4 + $0x60] sm:$0xff]
    %v174 = vld [vmem:[#allocation4 + $0x68] sm:$0xff]
    %v175 = vld [vmem:[#allocation4 + $0x70] sm:$0xff]
    %v176 = vld [vmem:[#allocation4 + $0x78] sm:$0xff]
    %v178 = vlaneseq
    %v179 = vshrl.u32 %v178, 7
    %v180 = vsub.s32 0, %v179
    %v181 = vrot.slane %v62, %v180
    %183 = vmatprep.subr.mxu0 0.0
    %184 = vmatpush1.msra.mxu0 %v161
    %185 = vmatprep.subr.mxu0 0.0
    %186 = vmatpush1.msra.mxu0 %v162
    %187 = vmatprep.subr.mxu0 0.0
    %188 = vmatpush1.msra.mxu0 %v163
    %189 = vmatprep.subr.mxu0 0.0
    %190 = vmatpush1.msra.mxu0 %v164
    %191 = vmatprep.subr.mxu0 0.0
    %192 = vmatpush1.msra.mxu0 %v165
    %193 = vmatprep.subr.mxu0 0.0
    %194 = vmatpush1.msra.mxu0 %v166
    %195 = vmatprep.subr.mxu0 0.0
    %196 = vmatpush1.msra.mxu0 %v167
    %197 = vmatprep.subr.mxu0 0.0
    %198 = vmatpush1.msra.mxu0 %v168
    %199 = vmatprep.subr.mxu0 0.0
    %200 = vmatpush1.msra.mxu0 %v169
    %201 = vmatprep.subr.mxu0 0.0
    %202 = vmatpush1.msra.mxu0 %v170
    %203 = vmatprep.subr.mxu0 0.0
    %204 = vmatpush1.msra.mxu0 %v171
    %205 = vmatprep.subr.mxu0 0.0
    %206 = vmatpush1.msra.mxu0 %v172
    %207 = vmatprep.subr.mxu0 0.0
    %208 = vmatpush1.msra.mxu0 %v173
    %209 = vmatprep.subr.mxu0 0.0
    %210 = vmatpush1.msra.mxu0 %v174
    %211 = vmatprep.subr.mxu0 0.0
    %212 = vmatpush1.msra.mxu0 %v175
    %213 = vmatprep.subr.mxu0 0.0
    %214 = vmatpush1.msra.mxu0 %v176
    %215 = vmatprep.subr.mxu0 0.0
    %216 = vmatpush1.msra.mxu0 0.0
    %217 = vmatprep.subr.mxu0 0.0
    %218 = vmatpush1.msra.mxu0 0.0
    %219 = vmatprep.subr.mxu0 0.0
    %220 = vmatpush1.msra.mxu0 0.0
    %221 = vmatprep.subr.mxu0 0.0
    %222 = vmatpush1.msra.mxu0 0.0
    %223 = vmatprep.subr.mxu0 0.0
    %224 = vmatpush1.msra.mxu0 0.0
    %225 = vmatprep.subr.mxu0 0.0
    %226 = vmatpush1.msra.mxu0 0.0
    %227 = vmatprep.subr.mxu0 0.0
    %228 = vmatpush1.msra.mxu0 0.0
    %229 = vmatprep.subr.mxu0 0.0
    %230 = vmatpush1.msra.mxu0 0.0
    %231 = vmatprep.subr.mxu0 0.0
    %232 = vmatpush1.msra.mxu0 0.0
    %233 = vmatprep.subr.mxu0 0.0
    %234 = vmatpush1.msra.mxu0 0.0
    %235 = vmatprep.subr.mxu0 0.0
    %236 = vmatpush1.msra.mxu0 0.0
    %237 = vmatprep.subr.mxu0 0.0
    %238 = vmatpush1.msra.mxu0 0.0
    %239 = vmatprep.subr.mxu0 0.0
    %240 = vmatpush1.msra.mxu0 0.0
    %241 = vmatprep.subr.mxu0 0.0
    %242 = vmatpush1.msra.mxu0 0.0
    %243 = vmatprep.subr.mxu0 0.0
    %244 = vmatpush1.msra.mxu0 0.0
    %245 = vmatprep.subr.mxu0 0.0
    %246 = vmatpush1.msra.mxu0 0.0
    %247 = vmatprep.mubr.f32.mxu0 0.0
    %248 = vmatmul.mubr.f32.gmra.mrb[0].mxu0 %v159
    %v249 = vpop.f32.mrb[0].mxu0
    %v250 = vadd.f32 %v181, %v249
    %v251 = vpop.f32.mrb[0].mxu0
    %252 = vmatprep.mubr.f32.mxu0 0.0
    %253 = vmatmul.mubr.f32.gmra.mrb[0].mxu0 %v160
    %v254 = vpop.f32.mrb[0].mxu0
    %v255 = vadd.f32 %v181, %v254
    %v256 = vpop.f32.mrb[0].mxu0
    %257 = vdwg.mxu0
    %v258 = vtanh.pop %v250
    %v259 = vtanh.pop %v255
    %v260 = vld [vmem:[#allocation6] sm:$0xff]
    %v261 = vld [vmem:[#allocation6 + $0x8] sm:$0xff]
    %v262 = vld [vmem:[#allocation6 + $0x10] sm:$0xff]
    %v263 = vld [vmem:[#allocation6 + $0x18] sm:$0xff]
    %v264 = vld [vmem:[#allocation6 + $0x20] sm:$0xff]
    %v265 = vld [vmem:[#allocation6 + $0x28] sm:$0xff]
    %v266 = vld [vmem:[#allocation6 + $0x30] sm:$0xff]
    %v267 = vld [vmem:[#allocation6 + $0x38] sm:$0xff]
    %v268 = vld [vmem:[#allocation6 + $0x40] sm:$0xff]
    %v269 = vld [vmem:[#allocation6 + $0x48] sm:$0xff]
    %v270 = vld [vmem:[#allocation6 + $0x50] sm:$0xff]
    %v271 = vld [vmem:[#allocation6 + $0x58] sm:$0xff]
    %v272 = vld [vmem:[#allocation6 + $0x60] sm:$0xff]
    %v273 = vld [vmem:[#allocation6 + $0x68] sm:$0xff]
    %v274 = vld [vmem:[#allocation6 + $0x70] sm:$0xff]
    %v275 = vld [vmem:[#allocation6 + $0x78] sm:$0xff]
    %v277 = vlaneseq
    %v278 = vshrl.u32 %v277, 7
    %v279 = vsub.s32 0, %v278
    %v280 = vrot.slane %v63, %v279
    %282 = vmatprep.subr.mxu0 0.0
    %283 = vmatpush1.msra.mxu0 %v260
    %284 = vmatprep.subr.mxu0 0.0
    %285 = vmatpush1.msra.mxu0 %v261
    %286 = vmatprep.subr.mxu0 0.0
    %287 = vmatpush1.msra.mxu0 %v262
    %288 = vmatprep.subr.mxu0 0.0
    %289 = vmatpush1.msra.mxu0 %v263
    %290 = vmatprep.subr.mxu0 0.0
    %291 = vmatpush1.msra.mxu0 %v264
    %292 = vmatprep.subr.mxu0 0.0
    %293 = vmatpush1.msra.mxu0 %v265
    %294 = vmatprep.subr.mxu0 0.0
    %295 = vmatpush1.msra.mxu0 %v266
    %296 = vmatprep.subr.mxu0 0.0
    %297 = vmatpush1.msra.mxu0 %v267
    %298 = vmatprep.subr.mxu0 0.0
    %299 = vmatpush1.msra.mxu0 %v268
    %300 = vmatprep.subr.mxu0 0.0
    %301 = vmatpush1.msra.mxu0 %v269
    %302 = vmatprep.subr.mxu0 0.0
    %303 = vmatpush1.msra.mxu0 %v270
    %304 = vmatprep.subr.mxu0 0.0
    %305 = vmatpush1.msra.mxu0 %v271
    %306 = vmatprep.subr.mxu0 0.0
    %307 = vmatpush1.msra.mxu0 %v272
    %308 = vmatprep.subr.mxu0 0.0
    %309 = vmatpush1.msra.mxu0 %v273
    %310 = vmatprep.subr.mxu0 0.0
    %311 = vmatpush1.msra.mxu0 %v274
    %312 = vmatprep.subr.mxu0 0.0
    %313 = vmatpush1.msra.mxu0 %v275
    %314 = vmatprep.subr.mxu0 0.0
    %315 = vmatpush1.msra.mxu0 0.0
    %316 = vmatprep.subr.mxu0 0.0
    %317 = vmatpush1.msra.mxu0 0.0
    %318 = vmatprep.subr.mxu0 0.0
    %319 = vmatpush1.msra.mxu0 0.0
    %320 = vmatprep.subr.mxu0 0.0
    %321 = vmatpush1.msra.mxu0 0.0
    %322 = vmatprep.subr.mxu0 0.0
    %323 = vmatpush1.msra.mxu0 0.0
    %324 = vmatprep.subr.mxu0 0.0
    %325 = vmatpush1.msra.mxu0 0.0
    %326 = vmatprep.subr.mxu0 0.0
    %327 = vmatpush1.msra.mxu0 0.0
    %328 = vmatprep.subr.mxu0 0.0
    %329 = vmatpush1.msra.mxu0 0.0
    %330 = vmatprep.subr.mxu0 0.0
    %331 = vmatpush1.msra.mxu0 0.0
    %332 = vmatprep.subr.mxu0 0.0
    %333 = vmatpush1.msra.mxu0 0.0
    %334 = vmatprep.subr.mxu0 0.0
    %335 = vmatpush1.msra.mxu0 0.0
    %336 = vmatprep.subr.mxu0 0.0
    %337 = vmatpush1.msra.mxu0 0.0
    %338 = vmatprep.subr.mxu0 0.0
    %339 = vmatpush1.msra.mxu0 0.0
    %340 = vmatprep.subr.mxu0 0.0
    %341 = vmatpush1.msra.mxu0 0.0
    %342 = vmatprep.subr.mxu0 0.0
    %343 = vmatpush1.msra.mxu0 0.0
    %344 = vmatprep.subr.mxu0 0.0
    %345 = vmatpush1.msra.mxu0 0.0
    %346 = vmatprep.mubr.f32.mxu0 0.0
    %347 = vmatmul.mubr.f32.gmra.mrb[0].mxu0 %v258
    %v348 = vpop.f32.mrb[0].mxu0
    %v349 = vadd.f32 %v280, %v348
    %v350 = vpop.f32.mrb[0].mxu0
    %351 = vmatprep.mubr.f32.mxu0 0.0
    %352 = vmatmul.mubr.f32.gmra.mrb[0].mxu0 %v259
    %v353 = vpop.f32.mrb[0].mxu0
    %v354 = vadd.f32 %v280, %v353
    %v355 = vpop.f32.mrb[0].mxu0
    %356 = vdwg.mxu0
    %357 = vst [vmem:[#allocation7] sm:$0xff] %v349
    %358 = vst [vmem:[#allocation7 + $0x8] sm:$0xff] %v354
    // Predicated region
    $region34: #{teacher_forward.1} parent=1 // pred_check
      _
    $region35: #{teacher_forward.1} parent=1 // pred_check_branch
      %360 = sbr.rel (0) target = $region37
    $region36: #{teacher_forward.1} parent=1 // pred_region
      // Predicated region
      $region38: #{teacher_forward.1} parent=36 // pred_check
        _
      $region39: #{teacher_forward.1} parent=36 // pred_check_branch
        %362 = sbr.rel (0) target = $region41
      $region40: #{teacher_forward.1} parent=36 // pred_region
        // Predicated region
        $region42: #{teacher_forward.1} parent=40 // pred_check
          _
        $region43: #{teacher_forward.1} parent=40 // pred_check_branch
          %364 = sbr.rel target = $region45
        $region44: #{teacher_forward.1} parent=40 // pred_region
          // Predicated region
          $region57: #{teacher_forward.1} parent=44 // pred_check
            _
          $region58: #{teacher_forward.1} parent=44 // pred_check_branch
            %379 = sbr.rel (0) target = $region60
          $region59: #{teacher_forward.1} parent=44 // pred_region
            loop: start=0, step=1, limit=1
            $region61: #{teacher_forward.1} parent=59 // loop_pre_header
              _
            $region62: #{teacher_forward.1} parent=59 // loop_header
              %s382 = sphi 0, %s386
              %p383 = scmp.ge.s32.totalorder %s382, 1
              %s387 = sphi [#allocation7], [#allocation7]
              %s388 = sphi %s5, %s5
            $region63: #{teacher_forward.1} parent=59 // loop_header_branch
              %385 = sbr.rel (%p383) target = $region67
            $region64: #{teacher_forward.1} parent=59 // loop_body
              %v389 = vld [vmem:[%s387] sm:$0x3]
              %390 = vst [vmem:[%s388] sm:$0x3] %v389
            $region65: #{teacher_forward.1} parent=59 // loop_footer
              %s386 = sadd.s32 1, %s382
            $region66: #{teacher_forward.1} parent=59 // loop_footer_branch
              %381 = sbr.rel target = $region62
            $region67: #{teacher_forward.1} parent=59 // loop_exit
              _
          $region60: #{teacher_forward.1} parent=44 // pred_fallthru
            _
        $region45: #{teacher_forward.1} parent=40 // pred_fallthru
          _
        // Predicated region
        $region46: #{teacher_forward.1} parent=40 // pred_check
          _
        $region47: #{teacher_forward.1} parent=40 // pred_check_branch
          %366 = sbr.rel (0) target = $region49
        $region48: #{teacher_forward.1} parent=40 // pred_region
          loop: start=0, step=1, limit=1
          $region50: #{teacher_forward.1} parent=48 // loop_pre_header
            _
          $region51: #{teacher_forward.1} parent=48 // loop_header
            %s369 = sphi 0, %s373
            %p370 = scmp.ge.s32.totalorder %s369, 1
            %s374 = sphi [#allocation7], [#allocation7]
            %s375 = sphi %s5, %s5
          $region52: #{teacher_forward.1} parent=48 // loop_header_branch
            %372 = sbr.rel (%p370) target = $region56
          $region53: #{teacher_forward.1} parent=48 // loop_body
            %v376 = vld [vmem:[%s374] sm:$0x3]
            %377 = vst [vmem:[%s375] sm:$0x3] %v376
          $region54: #{teacher_forward.1} parent=48 // loop_footer
            %s373 = sadd.s32 1, %s369
          $region55: #{teacher_forward.1} parent=48 // loop_footer_branch
            %368 = sbr.rel target = $region51
          $region56: #{teacher_forward.1} parent=48 // loop_exit
            _
        $region49: #{teacher_forward.1} parent=40 // pred_fallthru
          _
      $region41: #{teacher_forward.1} parent=36 // pred_fallthru
        _
      %391 = vnop
    $region37: #{teacher_forward.1} parent=1 // pred_fallthru
      _
    // Predicated region
    $region68: #{teacher_forward.1} parent=1 // pred_check
      _
    $region69: #{teacher_forward.1} parent=1 // pred_check_branch
      %393 = sbr.rel (0) target = $region71
    $region70: #{teacher_forward.1} parent=1 // pred_region
      _
    $region71: #{teacher_forward.1} parent=1 // pred_fallthru
      _
    %394 = vsyncpa [#allocation3], 1
    %395 = vsyncpa [#allocation5], 1

</llo_original>
